<compile_context>
chip_gen: v7x
topology: tpu7x:2x2x1
jax: 0.10.0
libtpu: 0.0.40
codegen_flags: <defaults>
</compile_context>

<pallas_src>
import math

import jax
import jax.numpy as jnp
from jax.experimental import pallas as pl
from jax.experimental.pallas import tpu as pltpu


def _ksm_local_kernel(x_ref, ln_w_ref, ln_b_ref, taps_ref, out_ref):
    """Fused LayerNorm(C) + Conv1d(1 -> KO, kernel K, 'same') on a batch tile.

    x_ref    : (TB, C)      f32  VMEM
    ln_w_ref : (1, C)       f32  VMEM
    ln_b_ref : (1, C)       f32  VMEM
    taps_ref : (KO * K,)    f32  SMEM   (flattened conv taps)
    out_ref  : (TB, KO, C)  f32  VMEM
    """
    TB, C = x_ref.shape
    KO = out_ref.shape[1]
    K = taps_ref.shape[0] // KO
    pad = (K - 1) // 2

    x = x_ref[...].astype(jnp.float32)

    # LayerNorm over the channel axis (eps = 1e-5, biased var; PyTorch default).
    mean = jnp.mean(x, axis=-1, keepdims=True)
    centered = x - mean
    var = jnp.mean(centered * centered, axis=-1, keepdims=True)
    xn = centered * jax.lax.rsqrt(var + 1e-5)
    xn = xn * ln_w_ref[...] + ln_b_ref[...]

    # Build the K shifted copies of xn ONCE (hoisted out of the KO loop).
    if pad > 0:
        zpad = jnp.zeros((TB, pad), dtype=xn.dtype)
        xp = jnp.concatenate([zpad, xn, zpad], axis=-1)   # (TB, C + K - 1)
        shifted = [xp[:, j:j + C] for j in range(K)]      # K slices, total
    else:
        shifted = [xn]

    # Cross-correlation (== PyTorch Conv1d): scalar-times-vector FMAs on the
    # VPU; each output channel is stored immediately so only one accumulator
    # is live at a time (no stack/relayout epilogue).
    for o in range(KO):
        acc = taps_ref[o * K] * shifted[0]
        for j in range(1, K):
            acc = acc + taps_ref[o * K + j] * shifted[j]
        out_ref[:, o, :] = acc.astype(out_ref.dtype)


def _pick_batch_tile(batch, channels, ko, budget_bytes=8 << 20):
    """Largest batch tile whose double-buffered f32 in+out blocks fit `budget`."""
    per_row = 2 * 4 * channels * (ko + 1)   # 2x buffering, f32, (C) in + (KO*C) out
    tb = max(1, budget_bytes // per_row)
    if tb >= batch:
        return batch                         # full dim -> always layout-legal
    return max(8, (tb // 8) * 8)             # keep the sublane dim 8-aligned


def ksm_local_forward(x, ln_weight, ln_bias, conv_weight, kernel_num, out_n):
    """x: (B, C, 1, 1) NCHW.  Returns att_logit: (B, kernel_num, C, out_n)."""
    B, C = x.shape[0], x.shape[1]
    KO = kernel_num * out_n
    K = conv_weight.shape[-1]

    # x.squeeze(-1).transpose(-1,-2) with H=W=1  ->  (B, 1, C); drop the 1.
    x2d = x[:, :, 0, 0].astype(jnp.float32)                  # (B, C)
    ln_w = ln_weight.reshape(1, C).astype(jnp.float32)       # (1, C)
    ln_b = ln_bias.reshape(1, C).astype(jnp.float32)         # (1, C)
    taps = conv_weight.reshape(KO * K).astype(jnp.float32)   # (KO*K,) SMEM taps

    TB = _pick_batch_tile(B, C, KO)
    grid = (pl.cdiv(B, TB),)

    cost = pl.CostEstimate(
        flops=2 * B * KO * K * C + 10 * B * C,
        transcendentals=B,
        bytes_accessed=4 * (B * C + 2 * C + KO * K + B * KO * C),
    )

    out = pl.pallas_call(
        _ksm_local_kernel,
        out_shape=jax.ShapeDtypeStruct((B, KO, C), jnp.float32),
        grid=grid,
        in_specs=[
            pl.BlockSpec((TB, C), lambda i: (i, 0)),
            pl.BlockSpec((1, C), lambda i: (0, 0)),
            pl.BlockSpec((1, C), lambda i: (0, 0)),
            pl.BlockSpec(memory_space=pltpu.MemorySpace.SMEM),
        ],
        out_specs=pl.BlockSpec((TB, KO, C), lambda i: (i, 0, 0)),
        compiler_params=pltpu.CompilerParams(
            dimension_semantics=("parallel",),
            vmem_limit_bytes=32 * 1024 * 1024,
        ),
        cost_estimate=cost,
    )(x2d, ln_w, ln_b, taps)                                  # (B, KO, C)

    # reshape(B, kn, out_n, C).permute(0, 1, 3, 2) -> (B, kn, C, out_n)
    # (kept outside the kernel to preserve the module's exact output layout;
    #  consumers that accept (B, kn, out_n, C) can skip this transpose.)
    att_logit = out.reshape(B, kernel_num, out_n, C).transpose(0, 1, 3, 2)
    return att_logit


def _reference(x, ln_weight, ln_bias, conv_weight, kernel_num, out_n):
    """Pure-JAX reference (lax conv) for numerical verification."""
    B, C = x.shape[0], x.shape[1]
    KO, _, K = conv_weight.shape
    pad = (K - 1) // 2
    xs = x[:, :, 0, 0].astype(jnp.float32)                    # (B, C)
    mean = jnp.mean(xs, axis=-1, keepdims=True)
    var = jnp.mean((xs - mean) ** 2, axis=-1, keepdims=True)
    xn = (xs - mean) / jnp.sqrt(var + 1e-5)
    xn = xn * ln_weight[None, :] + ln_bias[None, :]
    y = jax.lax.conv_general_dilated(
        xn[:, None, :], conv_weight,
        window_strides=(1,), padding=[(pad, pad)],
        dimension_numbers=("NCH", "OIH", "NCH"))               # (B, KO, C)
    return y.reshape(B, kernel_num, out_n, C).transpose(0, 1, 3, 2)


if __name__ == "__main__":
    # Small, module-consistent shapes.
    B, C = 2, 16
    kernel_num, out_n = 2, 4
    # k_size = round(log2(C)/2 + 0.5) // 2 * 2 + 1  (as in __init__)
    k_size = round(math.log2(C) / 2 + 0.5) // 2 * 2 + 1   # -> 3 for C=16
    KO = kernel_num * out_n

    # Deterministic parameters, matching the module's __init__:
    #   conv weight constant 1e-6, LayerNorm gamma=1 / beta=0.
    conv_weight = jnp.full((KO, 1, k_size), 1e-6, dtype=jnp.float32)
    ln_weight = jnp.ones((C,), dtype=jnp.float32)
    ln_bias = jnp.zeros((C,), dtype=jnp.float32)

    # Deterministic example input (NCHW, spatial 1x1 as in FDConv usage).
    key = jax.random.PRNGKey(0)
    x = jax.random.normal(key, (B, C, 1, 1), dtype=jnp.float32)

    att = ksm_local_forward(x, ln_weight, ln_bias, conv_weight,
                            kernel_num, out_n)
    att = jax.block_until_ready(att)

    ref = _reference(x, ln_weight, ln_bias, conv_weight, kernel_num, out_n)

    assert att.shape == (B, kernel_num, C, out_n), att.shape
    assert jnp.allclose(att, ref, atol=1e-6, rtol=1e-5), (
        float(jnp.max(jnp.abs(att - ref))))

    print("KERNEL_OK")
</pallas_src>

<mosaic_0001>
module attributes {stable_mosaic.version = 11 : i64} {
  func.func @_ksm_local_kernel(%arg0: i32, %arg1: memref<2x16xf32, #tpu.memory_space<vmem>>, %arg2: memref<1x16xf32, #tpu.memory_space<vmem>>, %arg3: memref<1x16xf32, #tpu.memory_space<vmem>>, %arg4: memref<24xf32, #tpu.memory_space<smem>>, %arg5: memref<2x8x16xf32, #tpu.memory_space<vmem>>) attributes {dimension_semantics = [#tpu.dimension_semantics<parallel>], iteration_bounds = array<i64: 1>, scalar_prefetch = 0 : i64, scratch_operands = 0 : i64, tpu.core_type = #tpu.core_type<tc>, window_params = [{transform_indices = @transform_0, window_bounds = array<i64: 2, 16>}, {pipeline_mode = #tpu.pipeline_mode<synchronous>, transform_indices = @transform_1, window_bounds = array<i64: 1, 16>}, {pipeline_mode = #tpu.pipeline_mode<synchronous>, transform_indices = @transform_2, window_bounds = array<i64: 1, 16>}, {transform_indices = @transform_3, window_bounds = array<i64: 24>}, {transform_indices = @transform_4, window_bounds = array<i64: 2, 8, 16>}]} {
    %c0 = arith.constant 0 : index
    %c0_0 = arith.constant 0 : index
    %0 = vector.load %arg1[%c0, %c0_0] : memref<2x16xf32, #tpu.memory_space<vmem>>, vector<2x16xf32>
    %cst = arith.constant dense<0.000000e+00> : vector<2xf32>
    %1 = vector.multi_reduction <add>, %0, %cst [1] : vector<2x16xf32> to vector<2xf32>
    %2 = vector.shape_cast %1 : vector<2xf32> to vector<2x1xf32>
    %cst_1 = arith.constant 1.600000e+01 : f32
    %3 = vector.broadcast %cst_1 : f32 to vector<2x1xf32>
    %4 = arith.divf %2, %3 : vector<2x1xf32>
    %5 = vector.broadcast %4 : vector<2x1xf32> to vector<2x16xf32>
    %6 = arith.subf %0, %5 : vector<2x16xf32>
    %7 = arith.mulf %6, %6 : vector<2x16xf32>
    %cst_2 = arith.constant dense<0.000000e+00> : vector<2xf32>
    %8 = vector.multi_reduction <add>, %7, %cst_2 [1] : vector<2x16xf32> to vector<2xf32>
    %9 = vector.shape_cast %8 : vector<2xf32> to vector<2x1xf32>
    %cst_3 = arith.constant 1.600000e+01 : f32
    %10 = vector.broadcast %cst_3 : f32 to vector<2x1xf32>
    %11 = arith.divf %9, %10 : vector<2x1xf32>
    %cst_4 = arith.constant 9.99999974E-6 : f32
    %12 = vector.broadcast %cst_4 : f32 to vector<2x1xf32>
    %13 = arith.addf %11, %12 : vector<2x1xf32>
    %14 = math.rsqrt %13 : vector<2x1xf32>
    %15 = vector.broadcast %14 : vector<2x1xf32> to vector<2x16xf32>
    %16 = arith.mulf %6, %15 : vector<2x16xf32>
    %c0_5 = arith.constant 0 : index
    %c0_6 = arith.constant 0 : index
    %17 = vector.load %arg2[%c0_5, %c0_6] : memref<1x16xf32, #tpu.memory_space<vmem>>, vector<1x16xf32>
    %18 = vector.broadcast %17 : vector<1x16xf32> to vector<2x16xf32>
    %19 = arith.mulf %16, %18 : vector<2x16xf32>
    %c0_7 = arith.constant 0 : index
    %c0_8 = arith.constant 0 : index
    %20 = vector.load %arg3[%c0_7, %c0_8] : memref<1x16xf32, #tpu.memory_space<vmem>>, vector<1x16xf32>
    %21 = vector.broadcast %20 : vector<1x16xf32> to vector<2x16xf32>
    %22 = arith.addf %19, %21 : vector<2x16xf32>
    %cst_9 = arith.constant 0.000000e+00 : f32
    %23 = vector.broadcast %cst_9 : f32 to vector<2x1xf32>
    %24 = tpu.concatenate %23, %22, %23 in 1 : vector<2x1xf32>, vector<2x16xf32>, vector<2x1xf32> -> vector<2x18xf32>
    %25 = vector.extract_strided_slice %24 {offsets = [0, 0], sizes = [2, 16], strides = [1, 1]} : vector<2x18xf32> to vector<2x16xf32>
    %26 = vector.extract_strided_slice %24 {offsets = [0, 1], sizes = [2, 16], strides = [1, 1]} : vector<2x18xf32> to vector<2x16xf32>
    %27 = vector.extract_strided_slice %24 {offsets = [0, 2], sizes = [2, 16], strides = [1, 1]} : vector<2x18xf32> to vector<2x16xf32>
    %c0_10 = arith.constant 0 : index
    %28 = memref.load %arg4[%c0_10] : memref<24xf32, #tpu.memory_space<smem>>
    %29 = vector.broadcast %28 : f32 to vector<2x16xf32>
    %30 = arith.mulf %29, %25 : vector<2x16xf32>
    %c1 = arith.constant 1 : index
    %31 = memref.load %arg4[%c1] : memref<24xf32, #tpu.memory_space<smem>>
    %32 = vector.broadcast %31 : f32 to vector<2x16xf32>
    %33 = arith.mulf %32, %26 : vector<2x16xf32>
    %34 = arith.addf %30, %33 : vector<2x16xf32>
    %c2 = arith.constant 2 : index
    %35 = memref.load %arg4[%c2] : memref<24xf32, #tpu.memory_space<smem>>
    %36 = vector.broadcast %35 : f32 to vector<2x16xf32>
    %37 = arith.mulf %36, %27 : vector<2x16xf32>
    %38 = arith.addf %34, %37 : vector<2x16xf32>
    %c0_11 = arith.constant 0 : index
    %c0_12 = arith.constant 0 : index
    %c0_13 = arith.constant 0 : index
    %39 = vector.load %arg5[%c0_11, %c0_12, %c0_13] : memref<2x8x16xf32, #tpu.memory_space<vmem>>, vector<2x1x16xf32>
    %40 = vector.shape_cast %39 : vector<2x1x16xf32> to vector<2x16xf32>
    %41 = vector.shape_cast %38 : vector<2x16xf32> to vector<2x1x16xf32>
    tpu.vector_store %arg5[%c0_11, %c0_12, %c0_13], %41 {strides = array<i32>} : memref<2x8x16xf32, #tpu.memory_space<vmem>>, vector<2x1x16xf32>,
    %c3 = arith.constant 3 : index
    %42 = memref.load %arg4[%c3] : memref<24xf32, #tpu.memory_space<smem>>
    %43 = vector.broadcast %42 : f32 to vector<2x16xf32>
    %44 = arith.mulf %43, %25 : vector<2x16xf32>
    %c4 = arith.constant 4 : index
    %45 = memref.load %arg4[%c4] : memref<24xf32, #tpu.memory_space<smem>>
    %46 = vector.broadcast %45 : f32 to vector<2x16xf32>
    %47 = arith.mulf %46, %26 : vector<2x16xf32>
    %48 = arith.addf %44, %47 : vector<2x16xf32>
    %c5 = arith.constant 5 : index
    %49 = memref.load %arg4[%c5] : memref<24xf32, #tpu.memory_space<smem>>
    %50 = vector.broadcast %49 : f32 to vector<2x16xf32>
    %51 = arith.mulf %50, %27 : vector<2x16xf32>
    %52 = arith.addf %48, %51 : vector<2x16xf32>
    %c0_14 = arith.constant 0 : index
    %c1_15 = arith.constant 1 : index
    %c0_16 = arith.constant 0 : index
    %53 = vector.load %arg5[%c0_14, %c1_15, %c0_16] : memref<2x8x16xf32, #tpu.memory_space<vmem>>, vector<2x1x16xf32>
    %54 = vector.shape_cast %53 : vector<2x1x16xf32> to vector<2x16xf32>
    %55 = vector.shape_cast %52 : vector<2x16xf32> to vector<2x1x16xf32>
    tpu.vector_store %arg5[%c0_14, %c1_15, %c0_16], %55 {strides = array<i32>} : memref<2x8x16xf32, #tpu.memory_space<vmem>>, vector<2x1x16xf32>,
    %c6 = arith.constant 6 : index
    %56 = memref.load %arg4[%c6] : memref<24xf32, #tpu.memory_space<smem>>
    %57 = vector.broadcast %56 : f32 to vector<2x16xf32>
    %58 = arith.mulf %57, %25 : vector<2x16xf32>
    %c7 = arith.constant 7 : index
    %59 = memref.load %arg4[%c7] : memref<24xf32, #tpu.memory_space<smem>>
    %60 = vector.broadcast %59 : f32 to vector<2x16xf32>
    %61 = arith.mulf %60, %26 : vector<2x16xf32>
    %62 = arith.addf %58, %61 : vector<2x16xf32>
    %c8 = arith.constant 8 : index
    %63 = memref.load %arg4[%c8] : memref<24xf32, #tpu.memory_space<smem>>
    %64 = vector.broadcast %63 : f32 to vector<2x16xf32>
    %65 = arith.mulf %64, %27 : vector<2x16xf32>
    %66 = arith.addf %62, %65 : vector<2x16xf32>
    %c0_17 = arith.constant 0 : index
    %c2_18 = arith.constant 2 : index
    %c0_19 = arith.constant 0 : index
    %67 = vector.load %arg5[%c0_17, %c2_18, %c0_19] : memref<2x8x16xf32, #tpu.memory_space<vmem>>, vector<2x1x16xf32>
    %68 = vector.shape_cast %67 : vector<2x1x16xf32> to vector<2x16xf32>
    %69 = vector.shape_cast %66 : vector<2x16xf32> to vector<2x1x16xf32>
    tpu.vector_store %arg5[%c0_17, %c2_18, %c0_19], %69 {strides = array<i32>} : memref<2x8x16xf32, #tpu.memory_space<vmem>>, vector<2x1x16xf32>,
    %c9 = arith.constant 9 : index
    %70 = memref.load %arg4[%c9] : memref<24xf32, #tpu.memory_space<smem>>
    %71 = vector.broadcast %70 : f32 to vector<2x16xf32>
    %72 = arith.mulf %71, %25 : vector<2x16xf32>
    %c10 = arith.constant 10 : index
    %73 = memref.load %arg4[%c10] : memref<24xf32, #tpu.memory_space<smem>>
    %74 = vector.broadcast %73 : f32 to vector<2x16xf32>
    %75 = arith.mulf %74, %26 : vector<2x16xf32>
    %76 = arith.addf %72, %75 : vector<2x16xf32>
    %c11 = arith.constant 11 : index
    %77 = memref.load %arg4[%c11] : memref<24xf32, #tpu.memory_space<smem>>
    %78 = vector.broadcast %77 : f32 to vector<2x16xf32>
    %79 = arith.mulf %78, %27 : vector<2x16xf32>
    %80 = arith.addf %76, %79 : vector<2x16xf32>
    %c0_20 = arith.constant 0 : index
    %c3_21 = arith.constant 3 : index
    %c0_22 = arith.constant 0 : index
    %81 = vector.load %arg5[%c0_20, %c3_21, %c0_22] : memref<2x8x16xf32, #tpu.memory_space<vmem>>, vector<2x1x16xf32>
    %82 = vector.shape_cast %81 : vector<2x1x16xf32> to vector<2x16xf32>
    %83 = vector.shape_cast %80 : vector<2x16xf32> to vector<2x1x16xf32>
    tpu.vector_store %arg5[%c0_20, %c3_21, %c0_22], %83 {strides = array<i32>} : memref<2x8x16xf32, #tpu.memory_space<vmem>>, vector<2x1x16xf32>,
    %c12 = arith.constant 12 : index
    %84 = memref.load %arg4[%c12] : memref<24xf32, #tpu.memory_space<smem>>
    %85 = vector.broadcast %84 : f32 to vector<2x16xf32>
    %86 = arith.mulf %85, %25 : vector<2x16xf32>
    %c13 = arith.constant 13 : index
    %87 = memref.load %arg4[%c13] : memref<24xf32, #tpu.memory_space<smem>>
    %88 = vector.broadcast %87 : f32 to vector<2x16xf32>
    %89 = arith.mulf %88, %26 : vector<2x16xf32>
    %90 = arith.addf %86, %89 : vector<2x16xf32>
    %c14 = arith.constant 14 : index
    %91 = memref.load %arg4[%c14] : memref<24xf32, #tpu.memory_space<smem>>
    %92 = vector.broadcast %91 : f32 to vector<2x16xf32>
    %93 = arith.mulf %92, %27 : vector<2x16xf32>
    %94 = arith.addf %90, %93 : vector<2x16xf32>
    %c0_23 = arith.constant 0 : index
    %c4_24 = arith.constant 4 : index
    %c0_25 = arith.constant 0 : index
    %95 = vector.load %arg5[%c0_23, %c4_24, %c0_25] : memref<2x8x16xf32, #tpu.memory_space<vmem>>, vector<2x1x16xf32>
    %96 = vector.shape_cast %95 : vector<2x1x16xf32> to vector<2x16xf32>
    %97 = vector.shape_cast %94 : vector<2x16xf32> to vector<2x1x16xf32>
    tpu.vector_store %arg5[%c0_23, %c4_24, %c0_25], %97 {strides = array<i32>} : memref<2x8x16xf32, #tpu.memory_space<vmem>>, vector<2x1x16xf32>,
    %c15 = arith.constant 15 : index
    %98 = memref.load %arg4[%c15] : memref<24xf32, #tpu.memory_space<smem>>
    %99 = vector.broadcast %98 : f32 to vector<2x16xf32>
    %100 = arith.mulf %99, %25 : vector<2x16xf32>
    %c16 = arith.constant 16 : index
    %101 = memref.load %arg4[%c16] : memref<24xf32, #tpu.memory_space<smem>>
    %102 = vector.broadcast %101 : f32 to vector<2x16xf32>
    %103 = arith.mulf %102, %26 : vector<2x16xf32>
    %104 = arith.addf %100, %103 : vector<2x16xf32>
    %c17 = arith.constant 17 : index
    %105 = memref.load %arg4[%c17] : memref<24xf32, #tpu.memory_space<smem>>
    %106 = vector.broadcast %105 : f32 to vector<2x16xf32>
    %107 = arith.mulf %106, %27 : vector<2x16xf32>
    %108 = arith.addf %104, %107 : vector<2x16xf32>
    %c0_26 = arith.constant 0 : index
    %c5_27 = arith.constant 5 : index
    %c0_28 = arith.constant 0 : index
    %109 = vector.load %arg5[%c0_26, %c5_27, %c0_28] : memref<2x8x16xf32, #tpu.memory_space<vmem>>, vector<2x1x16xf32>
    %110 = vector.shape_cast %109 : vector<2x1x16xf32> to vector<2x16xf32>
    %111 = vector.shape_cast %108 : vector<2x16xf32> to vector<2x1x16xf32>
    tpu.vector_store %arg5[%c0_26, %c5_27, %c0_28], %111 {strides = array<i32>} : memref<2x8x16xf32, #tpu.memory_space<vmem>>, vector<2x1x16xf32>,
    %c18 = arith.constant 18 : index
    %112 = memref.load %arg4[%c18] : memref<24xf32, #tpu.memory_space<smem>>
    %113 = vector.broadcast %112 : f32 to vector<2x16xf32>
    %114 = arith.mulf %113, %25 : vector<2x16xf32>
    %c19 = arith.constant 19 : index
    %115 = memref.load %arg4[%c19] : memref<24xf32, #tpu.memory_space<smem>>
    %116 = vector.broadcast %115 : f32 to vector<2x16xf32>
    %117 = arith.mulf %116, %26 : vector<2x16xf32>
    %118 = arith.addf %114, %117 : vector<2x16xf32>
    %c20 = arith.constant 20 : index
    %119 = memref.load %arg4[%c20] : memref<24xf32, #tpu.memory_space<smem>>
    %120 = vector.broadcast %119 : f32 to vector<2x16xf32>
    %121 = arith.mulf %120, %27 : vector<2x16xf32>
    %122 = arith.addf %118, %121 : vector<2x16xf32>
    %c0_29 = arith.constant 0 : index
    %c6_30 = arith.constant 6 : index
    %c0_31 = arith.constant 0 : index
    %123 = vector.load %arg5[%c0_29, %c6_30, %c0_31] : memref<2x8x16xf32, #tpu.memory_space<vmem>>, vector<2x1x16xf32>
    %124 = vector.shape_cast %123 : vector<2x1x16xf32> to vector<2x16xf32>
    %125 = vector.shape_cast %122 : vector<2x16xf32> to vector<2x1x16xf32>
    tpu.vector_store %arg5[%c0_29, %c6_30, %c0_31], %125 {strides = array<i32>} : memref<2x8x16xf32, #tpu.memory_space<vmem>>, vector<2x1x16xf32>,
    %c21 = arith.constant 21 : index
    %126 = memref.load %arg4[%c21] : memref<24xf32, #tpu.memory_space<smem>>
    %127 = vector.broadcast %126 : f32 to vector<2x16xf32>
    %128 = arith.mulf %127, %25 : vector<2x16xf32>
    %c22 = arith.constant 22 : index
    %129 = memref.load %arg4[%c22] : memref<24xf32, #tpu.memory_space<smem>>
    %130 = vector.broadcast %129 : f32 to vector<2x16xf32>
    %131 = arith.mulf %130, %26 : vector<2x16xf32>
    %132 = arith.addf %128, %131 : vector<2x16xf32>
    %c23 = arith.constant 23 : index
    %133 = memref.load %arg4[%c23] : memref<24xf32, #tpu.memory_space<smem>>
    %134 = vector.broadcast %133 : f32 to vector<2x16xf32>
    %135 = arith.mulf %134, %27 : vector<2x16xf32>
    %136 = arith.addf %132, %135 : vector<2x16xf32>
    %c0_32 = arith.constant 0 : index
    %c7_33 = arith.constant 7 : index
    %c0_34 = arith.constant 0 : index
    %137 = vector.load %arg5[%c0_32, %c7_33, %c0_34] : memref<2x8x16xf32, #tpu.memory_space<vmem>>, vector<2x1x16xf32>
    %138 = vector.shape_cast %137 : vector<2x1x16xf32> to vector<2x16xf32>
    %139 = vector.shape_cast %136 : vector<2x16xf32> to vector<2x1x16xf32>
    tpu.vector_store %arg5[%c0_32, %c7_33, %c0_34], %139 {strides = array<i32>} : memref<2x8x16xf32, #tpu.memory_space<vmem>>, vector<2x1x16xf32>,
    return
  }
  func.func @transform_0(%arg0: i32) -> (i32, i32) {
    %c0_i32 = arith.constant 0 : i32
    %c0_i32_0 = arith.constant 0 : i32
    return %arg0, %c0_i32 : i32, i32
  }
  func.func @transform_1(%arg0: i32) -> (i32, i32) {
    %c0_i32 = arith.constant 0 : i32
    %c0_i32_0 = arith.constant 0 : i32
    %c0_i32_1 = arith.constant 0 : i32
    return %c0_i32, %c0_i32_0 : i32, i32
  }
  func.func @transform_2(%arg0: i32) -> (i32, i32) {
    %c0_i32 = arith.constant 0 : i32
    %c0_i32_0 = arith.constant 0 : i32
    %c0_i32_1 = arith.constant 0 : i32
    return %c0_i32, %c0_i32_0 : i32, i32
  }
  func.func @transform_3(%arg0: i32) -> i32 {
    %c0_i32 = arith.constant 0 : i32
    %c0_i32_0 = arith.constant 0 : i32
    return %c0_i32 : i32
  }
  func.func @transform_4(%arg0: i32) -> (i32, i32, i32) {
    %c0_i32 = arith.constant 0 : i32
    %c0_i32_0 = arith.constant 0 : i32
    %c0_i32_1 = arith.constant 0 : i32
    return %arg0, %c0_i32, %c0_i32_0 : i32, i32, i32
  }
}

</mosaic_0001>

<llo_original>
// kernel: tpu_custom_call.1
$region0: #{tpu_custom_call.1}
  #allocation0 [shape = 'u32[]', space=smem, size = 0x4, offset = 0x4, fixed_abs, tag = 'smem constant byte address 0x4 - core index']
  #allocation1 [shape = 'u32[144,128]{1,0:T(1,128)}', space=vmem, size = 0x12000, scoped, tag = 'internal scratch']
  %s0 = inlined_call_operand.hbm [shape: f32[2,16], index: 0, kind: input, shape index: {}]
  %s1 = inlined_call_operand.vmem [shape: f32[1,16], index: 1, kind: input, shape index: {}]
  %s2 = inlined_call_operand.vmem [shape: f32[1,16], index: 2, kind: input, shape index: {}]
  %s3 = inlined_call_operand.vmem [shape: f32[24], index: 3, kind: input, shape index: {}]
  %s4 = inlined_call_operand.hbm [shape: f32[2,8,16], index: 4, kind: output, shape index: {}]
  %s5 = sld [smem:[#allocation0]]
  $region34: #{tpu_custom_call.1} parent=0
    _
  %s7 = ssub.s32 1, %s5
  %s8 = scalar_select 0, %s7, %s5
  $region1: #{tpu_custom_call.1} parent=0
    #allocation2 [shape = 'u8[1024]{0}', space=vmem, size = 0x400, scoped, tag = 'input window, operand 0, single buffered']
    #allocation3 [shape = 's32[1]{0}', space=sflag, size = 0x4, scoped, tag = 'scoped memory for tpu_custom_call.1']
    #allocation4 [shape = 's32[1]{0}', space=sflag, size = 0x4, scoped, tag = 'scoped memory for tpu_custom_call.1']
    #allocation5 [shape = 's32[1]{0}', space=sflag, size = 0x4, scoped, tag = 'scoped memory for tpu_custom_call.1']
    #allocation6 [shape = 'u8[512]{0}', space=smem, size = 0x200, scoped, tag = 'input window, operand 3, single buffered']
    #allocation7 [shape = 'u8[8192]{0}', space=vmem, size = 0x2000, scoped, tag = 'output window, operand 0, single buffered']
    %9 = vsyncpa [#allocation3], 0
    %10 = vsyncpa [#allocation5], 0
    %11 = vsyncpa [#allocation4], 0
    // Predicated region
    $region2: #{tpu_custom_call.1} parent=1 // pred_check
      _
    $region3: #{tpu_custom_call.1} parent=1 // pred_check_branch
      %13 = sbr.rel (0) target = $region5
    $region4: #{tpu_custom_call.1} parent=1 // pred_region
      %s15 = ssub.s32 32, 32
      %16 = vsyncadd [#allocation3], %s15
      %s18 = sshll.u32 [#allocation2], 4
      %s19 = int_to_ptr.vmem [resolvable:$true] %s18
      %21 = dma.hbm_to_vmem [thread:$0]  %s0, 32, %s19, [#allocation3]
    $region5: #{tpu_custom_call.1} parent=1 // pred_fallthru
      _
    // Predicated region
    $region6: #{tpu_custom_call.1} parent=1 // pred_check
      _
    $region7: #{tpu_custom_call.1} parent=1 // pred_check_branch
      %23 = sbr.rel (0) target = $region9
    $region8: #{tpu_custom_call.1} parent=1 // pred_region
      _
    $region9: #{tpu_custom_call.1} parent=1 // pred_fallthru
      _
    // Predicated region
    $region10: #{tpu_custom_call.1} parent=1 // pred_check
      _
    $region11: #{tpu_custom_call.1} parent=1 // pred_check_branch
      %25 = sbr.rel (0) target = $region13
    $region12: #{tpu_custom_call.1} parent=1 // pred_region
      _
    $region13: #{tpu_custom_call.1} parent=1 // pred_fallthru
      _
    // Predicated region
    $region14: #{tpu_custom_call.1} parent=1 // pred_check
      _
    $region15: #{tpu_custom_call.1} parent=1 // pred_check_branch
      %27 = sbr.rel (0) target = $region17
    $region16: #{tpu_custom_call.1} parent=1 // pred_region
      %s29 = ssub.s32 16, 16
      %30 = vsyncadd [#allocation5], %s29
      %s32 = sshll.u32 %s3, 4
      %s33 = int_to_ptr.vmem [resolvable:$true] %s32
      %35 = dma.vmem_to_smem %s33, 16, [#allocation6], [#allocation5]
    $region17: #{tpu_custom_call.1} parent=1 // pred_fallthru
      _
    // Predicated region
    $region18: #{tpu_custom_call.1} parent=1 // pred_check
      _
    $region19: #{tpu_custom_call.1} parent=1 // pred_check_branch
      %37 = sbr.rel (0) target = $region21
    $region20: #{tpu_custom_call.1} parent=1 // pred_region
      %38 = dma.done [#allocation3], 32
    $region21: #{tpu_custom_call.1} parent=1 // pred_fallthru
      _
    // Predicated region
    $region22: #{tpu_custom_call.1} parent=1 // pred_check
      _
    $region23: #{tpu_custom_call.1} parent=1 // pred_check_branch
      %40 = sbr.rel (0) target = $region25
    $region24: #{tpu_custom_call.1} parent=1 // pred_region
      %41 = dma.done [#allocation5], 16
    $region25: #{tpu_custom_call.1} parent=1 // pred_fallthru
      _
    %42 = sfence
    %v43 = vld [vmem:[#allocation2] sm:$0x3]
    %vm44 = vcmask 123904
    %v45 = vsel %vm44, %v43, 0.0
    %46 = vadd.xlane.f32.xlu0 %v45
    %v47 = vpop.xlane.xlu0 %46
    %v48 = vrcp.pop 16.0
    %v49 = vmul.f32 %v47, %v48
    %v50 = vsub.f32 %v43, %v49
    %v51 = vmul.f32 %v50, %v50
    %v52 = vsel %vm44, %v51, 0.0
    %53 = vadd.xlane.f32.xlu0 %v52
    %v54 = vpop.xlane.xlu0 %53
    %v55 = vmul.f32 %v54, %v48
    %v56 = vadd.f32 %v55, 1e-05
    %v57 = vrsqrt.pop %v56
    %v58 = vmul.f32 %v50, %v57
    %v59 = vld [vmem:[%s1] sm:$0x1]
    %v61 = vlaneseq
    %v62 = vshrl.u32 %v61, 7
    %v63 = vsub.s32 0, %v62
    %v64 = vrot.slane %v59, %v63
    %v66 = vmul.f32 %v58, %v64
    %v67 = vld [vmem:[%s2] sm:$0x1]
    %v69 = vlaneseq
    %v70 = vshrl.u32 %v69, 7
    %v71 = vsub.s32 0, %v70
    %v72 = vrot.slane %v67, %v71
    %v74 = vadd.f32 %v66, %v72
    %76 = vrot.lane.b32.xlu0 %v74, 1
    %v77 = vpop.permute.xlu0 %76
    %vm79 = vcmask 7168
    %v80 = vsel %vm79, 0.0, %v77
    %vm81 = vcmask 138240
    %v82 = vsel %vm81, %v80, 0.0
    %s83 = sld [smem:[#allocation6]]
    %v84 = vstv %s83
    %v85 = vmul.f32 %v84, %v82
    %s86 = sld [smem:[#allocation6 + $0x1]]
    %v87 = vstv %s86
    %v88 = vmul.f32 %v87, %v82
    %90 = vrot.lane.b32.xlu0 %v88, 127
    %v91 = vpop.permute.xlu0 %90
    %v93 = vadd.f32 %v85, %v91
    %s94 = sld [smem:[#allocation6 + $0x2]]
    %v95 = vstv %s94
    %v96 = vmul.f32 %v95, %v82
    %98 = vrot.lane.b32.xlu0 %v96, 126
    %v99 = vpop.permute.xlu0 %98
    %v101 = vadd.f32 %v93, %v99
    %v104 = vunpack.c.l.s4 1966171168
    %v105 = vunpack.c.0.s8 %v104
    %v106 = vlaneseq
    %v107 = vshrl.u32 %v106, 7
    %v108 = vsub.s32 %v105, %v107
    %v109 = vrot.slane %v101, %v108
    %v110 = vcombine.high %v109, %v109
    %v112 = vunpack.c.l.s4 1966171168
    %v113 = vunpack.c.0.s8 %v112
    %v114 = vlaneseq
    %v115 = vshrl.u32 %v114, 7
    %v116 = vsub.s32 %v113, %v115
    %v117 = vrot.slane %v109, %v116
    %v119 = vunpack.c.l.s4 1966171168
    %v120 = vunpack.c.0.s8 %v119
    %v121 = vlaneseq
    %v122 = vshrl.u32 %v121, 7
    %v123 = vsub.s32 %v120, %v122
    %v124 = vrot.slane %v110, %v123
    %vm127 = vcmask 122880
    %128 = vst.msk [vmem:[#allocation7] sm:$0x1] %vm127, %v117
    %129 = vst.msk [vmem:[#allocation7 + $0x8] sm:$0x1] %vm127, %v124
    %s130 = sld [smem:[#allocation6 + $0x3]]
    %v131 = vstv %s130
    %v132 = vmul.f32 %v131, %v82
    %s133 = sld [smem:[#allocation6 + $0x4]]
    %v134 = vstv %s133
    %v135 = vmul.f32 %v134, %v82
    %137 = vrot.lane.b32.xlu0 %v135, 127
    %v138 = vpop.permute.xlu0 %137
    %v140 = vadd.f32 %v132, %v138
    %s141 = sld [smem:[#allocation6 + $0x5]]
    %v142 = vstv %s141
    %v143 = vmul.f32 %v142, %v82
    %145 = vrot.lane.b32.xlu0 %v143, 126
    %v146 = vpop.permute.xlu0 %145
    %v148 = vadd.f32 %v140, %v146
    %v151 = vunpack.c.l.s4 1966171168
    %v152 = vunpack.c.0.s8 %v151
    %v153 = vlaneseq
    %v154 = vshrl.u32 %v153, 7
    %v155 = vsub.s32 %v152, %v154
    %v156 = vrot.slane %v148, %v155
    %v157 = vcombine.high %v156, %v156
    %v159 = vunpack.c.l.s4 1966171168
    %v160 = vunpack.c.0.s8 %v159
    %v161 = vlaneseq
    %v162 = vshrl.u32 %v161, 7
    %v163 = vsub.s32 %v160, %v162
    %v164 = vrot.slane %v156, %v163
    %v166 = vunpack.c.l.s4 1966171168
    %v167 = vunpack.c.0.s8 %v166
    %v168 = vlaneseq
    %v169 = vshrl.u32 %v168, 7
    %v170 = vsub.s32 %v167, %v169
    %v171 = vrot.slane %v157, %v170
    %174 = vst.msk [vmem:[#allocation7 + $0x1] sm:$0x1] %vm127, %v164
    %175 = vst.msk [vmem:[#allocation7 + $0x9] sm:$0x1] %vm127, %v171
    %s176 = sld [smem:[#allocation6 + $0x6]]
    %v177 = vstv %s176
    %v178 = vmul.f32 %v177, %v82
    %s179 = sld [smem:[#allocation6 + $0x7]]
    %v180 = vstv %s179
    %v181 = vmul.f32 %v180, %v82
    %183 = vrot.lane.b32.xlu0 %v181, 127
    %v184 = vpop.permute.xlu0 %183
    %v186 = vadd.f32 %v178, %v184
    %s187 = sld [smem:[#allocation6 + $0x8]]
    %v188 = vstv %s187
    %v189 = vmul.f32 %v188, %v82
    %191 = vrot.lane.b32.xlu0 %v189, 126
    %v192 = vpop.permute.xlu0 %191
    %v194 = vadd.f32 %v186, %v192
    %v197 = vunpack.c.l.s4 1966171168
    %v198 = vunpack.c.0.s8 %v197
    %v199 = vlaneseq
    %v200 = vshrl.u32 %v199, 7
    %v201 = vsub.s32 %v198, %v200
    %v202 = vrot.slane %v194, %v201
    %v203 = vcombine.high %v202, %v202
    %v205 = vunpack.c.l.s4 1966171168
    %v206 = vunpack.c.0.s8 %v205
    %v207 = vlaneseq
    %v208 = vshrl.u32 %v207, 7
    %v209 = vsub.s32 %v206, %v208
    %v210 = vrot.slane %v202, %v209
    %v212 = vunpack.c.l.s4 1966171168
    %v213 = vunpack.c.0.s8 %v212
    %v214 = vlaneseq
    %v215 = vshrl.u32 %v214, 7
    %v216 = vsub.s32 %v213, %v215
    %v217 = vrot.slane %v203, %v216
    %220 = vst.msk [vmem:[#allocation7 + $0x2] sm:$0x1] %vm127, %v210
    %221 = vst.msk [vmem:[#allocation7 + $0xa] sm:$0x1] %vm127, %v217
    %s222 = sld [smem:[#allocation6 + $0x9]]
    %v223 = vstv %s222
    %v224 = vmul.f32 %v223, %v82
    %s225 = sld [smem:[#allocation6 + $0xa]]
    %v226 = vstv %s225
    %v227 = vmul.f32 %v226, %v82
    %229 = vrot.lane.b32.xlu0 %v227, 127
    %v230 = vpop.permute.xlu0 %229
    %v232 = vadd.f32 %v224, %v230
    %s233 = sld [smem:[#allocation6 + $0xb]]
    %v234 = vstv %s233
    %v235 = vmul.f32 %v234, %v82
    %237 = vrot.lane.b32.xlu0 %v235, 126
    %v238 = vpop.permute.xlu0 %237
    %v240 = vadd.f32 %v232, %v238
    %v243 = vunpack.c.l.s4 1966171168
    %v244 = vunpack.c.0.s8 %v243
    %v245 = vlaneseq
    %v246 = vshrl.u32 %v245, 7
    %v247 = vsub.s32 %v244, %v246
    %v248 = vrot.slane %v240, %v247
    %v249 = vcombine.high %v248, %v248
    %v251 = vunpack.c.l.s4 1966171168
    %v252 = vunpack.c.0.s8 %v251
    %v253 = vlaneseq
    %v254 = vshrl.u32 %v253, 7
    %v255 = vsub.s32 %v252, %v254
    %v256 = vrot.slane %v248, %v255
    %v258 = vunpack.c.l.s4 1966171168
    %v259 = vunpack.c.0.s8 %v258
    %v260 = vlaneseq
    %v261 = vshrl.u32 %v260, 7
    %v262 = vsub.s32 %v259, %v261
    %v263 = vrot.slane %v249, %v262
    %266 = vst.msk [vmem:[#allocation7 + $0x3] sm:$0x1] %vm127, %v256
    %267 = vst.msk [vmem:[#allocation7 + $0xb] sm:$0x1] %vm127, %v263
    %s268 = sld [smem:[#allocation6 + $0xc]]
    %v269 = vstv %s268
    %v270 = vmul.f32 %v269, %v82
    %s271 = sld [smem:[#allocation6 + $0xd]]
    %v272 = vstv %s271
    %v273 = vmul.f32 %v272, %v82
    %275 = vrot.lane.b32.xlu0 %v273, 127
    %v276 = vpop.permute.xlu0 %275
    %v278 = vadd.f32 %v270, %v276
    %s279 = sld [smem:[#allocation6 + $0xe]]
    %v280 = vstv %s279
    %v281 = vmul.f32 %v280, %v82
    %283 = vrot.lane.b32.xlu0 %v281, 126
    %v284 = vpop.permute.xlu0 %283
    %v286 = vadd.f32 %v278, %v284
    %v289 = vunpack.c.l.s4 1966171168
    %v290 = vunpack.c.0.s8 %v289
    %v291 = vlaneseq
    %v292 = vshrl.u32 %v291, 7
    %v293 = vsub.s32 %v290, %v292
    %v294 = vrot.slane %v286, %v293
    %v295 = vcombine.high %v294, %v294
    %v297 = vunpack.c.l.s4 1966171168
    %v298 = vunpack.c.0.s8 %v297
    %v299 = vlaneseq
    %v300 = vshrl.u32 %v299, 7
    %v301 = vsub.s32 %v298, %v300
    %v302 = vrot.slane %v294, %v301
    %v304 = vunpack.c.l.s4 1966171168
    %v305 = vunpack.c.0.s8 %v304
    %v306 = vlaneseq
    %v307 = vshrl.u32 %v306, 7
    %v308 = vsub.s32 %v305, %v307
    %v309 = vrot.slane %v295, %v308
    %312 = vst.msk [vmem:[#allocation7 + $0x4] sm:$0x1] %vm127, %v302
    %313 = vst.msk [vmem:[#allocation7 + $0xc] sm:$0x1] %vm127, %v309
    %s314 = sld [smem:[#allocation6 + $0xf]]
    %v315 = vstv %s314
    %v316 = vmul.f32 %v315, %v82
    %s317 = sld [smem:[#allocation6 + $0x10]]
    %v318 = vstv %s317
    %v319 = vmul.f32 %v318, %v82
    %321 = vrot.lane.b32.xlu0 %v319, 127
    %v322 = vpop.permute.xlu0 %321
    %v324 = vadd.f32 %v316, %v322
    %s325 = sld [smem:[#allocation6 + $0x11]]
    %v326 = vstv %s325
    %v327 = vmul.f32 %v326, %v82
    %329 = vrot.lane.b32.xlu0 %v327, 126
    %v330 = vpop.permute.xlu0 %329
    %v332 = vadd.f32 %v324, %v330
    %v335 = vunpack.c.l.s4 1966171168
    %v336 = vunpack.c.0.s8 %v335
    %v337 = vlaneseq
    %v338 = vshrl.u32 %v337, 7
    %v339 = vsub.s32 %v336, %v338
    %v340 = vrot.slane %v332, %v339
    %v341 = vcombine.high %v340, %v340
    %v343 = vunpack.c.l.s4 1966171168
    %v344 = vunpack.c.0.s8 %v343
    %v345 = vlaneseq
    %v346 = vshrl.u32 %v345, 7
    %v347 = vsub.s32 %v344, %v346
    %v348 = vrot.slane %v340, %v347
    %v350 = vunpack.c.l.s4 1966171168
    %v351 = vunpack.c.0.s8 %v350
    %v352 = vlaneseq
    %v353 = vshrl.u32 %v352, 7
    %v354 = vsub.s32 %v351, %v353
    %v355 = vrot.slane %v341, %v354
    %358 = vst.msk [vmem:[#allocation7 + $0x5] sm:$0x1] %vm127, %v348
    %359 = vst.msk [vmem:[#allocation7 + $0xd] sm:$0x1] %vm127, %v355
    %s360 = sld [smem:[#allocation6 + $0x12]]
    %v361 = vstv %s360
    %v362 = vmul.f32 %v361, %v82
    %s363 = sld [smem:[#allocation6 + $0x13]]
    %v364 = vstv %s363
    %v365 = vmul.f32 %v364, %v82
    %367 = vrot.lane.b32.xlu0 %v365, 127
    %v368 = vpop.permute.xlu0 %367
    %v370 = vadd.f32 %v362, %v368
    %s371 = sld [smem:[#allocation6 + $0x14]]
    %v372 = vstv %s371
    %v373 = vmul.f32 %v372, %v82
    %375 = vrot.lane.b32.xlu0 %v373, 126
    %v376 = vpop.permute.xlu0 %375
    %v378 = vadd.f32 %v370, %v376
    %v381 = vunpack.c.l.s4 1966171168
    %v382 = vunpack.c.0.s8 %v381
    %v383 = vlaneseq
    %v384 = vshrl.u32 %v383, 7
    %v385 = vsub.s32 %v382, %v384
    %v386 = vrot.slane %v378, %v385
    %v387 = vcombine.high %v386, %v386
    %v389 = vunpack.c.l.s4 1966171168
    %v390 = vunpack.c.0.s8 %v389
    %v391 = vlaneseq
    %v392 = vshrl.u32 %v391, 7
    %v393 = vsub.s32 %v390, %v392
    %v394 = vrot.slane %v386, %v393
    %v396 = vunpack.c.l.s4 1966171168
    %v397 = vunpack.c.0.s8 %v396
    %v398 = vlaneseq
    %v399 = vshrl.u32 %v398, 7
    %v400 = vsub.s32 %v397, %v399
    %v401 = vrot.slane %v387, %v400
    %404 = vst.msk [vmem:[#allocation7 + $0x6] sm:$0x1] %vm127, %v394
    %405 = vst.msk [vmem:[#allocation7 + $0xe] sm:$0x1] %vm127, %v401
    %s406 = sld [smem:[#allocation6 + $0x15]]
    %v407 = vstv %s406
    %v408 = vmul.f32 %v407, %v82
    %s409 = sld [smem:[#allocation6 + $0x16]]
    %v410 = vstv %s409
    %v411 = vmul.f32 %v410, %v82
    %413 = vrot.lane.b32.xlu0 %v411, 127
    %v414 = vpop.permute.xlu0 %413
    %v416 = vadd.f32 %v408, %v414
    %s417 = sld [smem:[#allocation6 + $0x17]]
    %v418 = vstv %s417
    %v419 = vmul.f32 %v418, %v82
    %421 = vrot.lane.b32.xlu0 %v419, 126
    %v422 = vpop.permute.xlu0 %421
    %v424 = vadd.f32 %v416, %v422
    %v427 = vunpack.c.l.s4 1966171168
    %v428 = vunpack.c.0.s8 %v427
    %v429 = vlaneseq
    %v430 = vshrl.u32 %v429, 7
    %v431 = vsub.s32 %v428, %v430
    %v432 = vrot.slane %v424, %v431
    %v433 = vcombine.high %v432, %v432
    %v435 = vunpack.c.l.s4 1966171168
    %v436 = vunpack.c.0.s8 %v435
    %v437 = vlaneseq
    %v438 = vshrl.u32 %v437, 7
    %v439 = vsub.s32 %v436, %v438
    %v440 = vrot.slane %v432, %v439
    %v442 = vunpack.c.l.s4 1966171168
    %v443 = vunpack.c.0.s8 %v442
    %v444 = vlaneseq
    %v445 = vshrl.u32 %v444, 7
    %v446 = vsub.s32 %v443, %v445
    %v447 = vrot.slane %v433, %v446
    %450 = vst.msk [vmem:[#allocation7 + $0x7] sm:$0x1] %vm127, %v440
    %451 = vst.msk [vmem:[#allocation7 + $0xf] sm:$0x1] %vm127, %v447
    // Predicated region
    $region26: #{tpu_custom_call.1} parent=1 // pred_check
      _
    $region27: #{tpu_custom_call.1} parent=1 // pred_check_branch
      %453 = sbr.rel (0) target = $region29
    $region28: #{tpu_custom_call.1} parent=1 // pred_region
      %s455 = ssub.s32 256, 256
      %456 = vsyncadd [#allocation4], %s455
      %s457 = sshll.u32 [#allocation7], 4
      %s458 = int_to_ptr.vmem [resolvable:$true] %s457
      %463 = dma.vmem_to_hbm [thread:$0]  %s458, 256, %s4, [#allocation4], 128, 128, 8
    $region29: #{tpu_custom_call.1} parent=1 // pred_fallthru
      _
    // Predicated region
    $region30: #{tpu_custom_call.1} parent=1 // pred_check
      _
    $region31: #{tpu_custom_call.1} parent=1 // pred_check_branch
      %465 = sbr.rel (0) target = $region33
    $region32: #{tpu_custom_call.1} parent=1 // pred_region
      %466 = dma.done [#allocation4], 256
    $region33: #{tpu_custom_call.1} parent=1 // pred_fallthru
      _
    %467 = vsyncpa [#allocation3], 1
    %468 = vsyncpa [#allocation4], 1
    %469 = vsyncpa [#allocation5], 1

</llo_original>
